<compile_context>
chip_gen: v7x
topology: tpu7x:2x2x1
jax: 0.10.0
libtpu: 0.0.40
codegen_flags: <defaults>
</compile_context>

<pallas_src>
import jax
import jax.numpy as jnp
from jax.experimental import pallas as pl
from jax.experimental.pallas import tpu as pltpu


VMEM_LIMIT_BYTES = 40 << 20   # headroom under v7x's 64 MiB physical VMEM


# ------------------------------ Pallas kernels ------------------------------

def _patch_embed_kernel(x_ref, w_ref, pos_ref, b_ref, o_ref):
    # x: (TR, 4*p*p) bf16, w: (4*p*p, C) bf16, pos: (TR, C) f32, b: (1, C) f32
    y = jnp.dot(x_ref[...], w_ref[...], preferred_element_type=jnp.float32)
    o_ref[...] = (y + b_ref[...] + pos_ref[...]).astype(o_ref.dtype)


def _mlp1_kernel(x_ref, g_ref, beta_ref, w1_ref, b1_ref, w2_ref, b2_ref, o_ref):
    # Fused: LayerNorm(proj_in) -> Linear -> GELU(exact) -> Linear.
    # Norm statistics in f32; matmul operands bf16 with f32 MXU accumulation.
    x = x_ref[...].astype(jnp.float32)
    mu = jnp.mean(x, axis=-1, keepdims=True)
    var = jnp.mean(jnp.square(x - mu), axis=-1, keepdims=True)
    xn = (x - mu) * jax.lax.rsqrt(var + 1e-5) * g_ref[...] + beta_ref[...]
    h = jnp.dot(xn.astype(jnp.bfloat16), w1_ref[...],
                preferred_element_type=jnp.float32) + b1_ref[...]
    # nn.GELU() default is exact erf (tanh approx would be cheaper on v5e).
    h = jax.nn.gelu(h, approximate=False)
    y = jnp.dot(h.astype(jnp.bfloat16), w2_ref[...],
                preferred_element_type=jnp.float32) + b2_ref[...]
    o_ref[...] = y.astype(o_ref.dtype)


def _merge_lm_block_kernel(run_ref, text_ref, vis_ref, g_ref, w1_ref, w2_ref,
                           o_ref, vbuf, sem):
    # Fused merge_multimodal_embeddings + synthetic language-model block
    # (x + MLP(RMSNorm(x))).  run_ref (SMEM, scalar-prefetched) = [start, end)
    # of the contiguous IMG_CONTEXT run; vis_ref is the raw HBM ref of the
    # mlp1 output (memory_space=pl.ANY).
    tr = text_ref.shape[0]
    vp = vis_ref.shape[0]
    i = pl.program_id(0)
    run_start = run_ref[0]
    run_end = run_ref[1]

    u = i * tr - run_start               # vision row needed by local row 0
    c = jnp.clip(u, 0, vp - tr)          # clamped, in-bounds DMA window start
    s = jnp.clip(c - u, 0, tr)           # dest shift when the run starts mid-block
    t = jnp.clip(u - c, 0, tr)           # read shift when the window was clamped
    cp = pltpu.make_async_copy(vis_ref.at[pl.ds(c, tr), :],
                               vbuf.at[pl.ds(s, tr), :], sem)
    cp.start()
    cp.wait()

    row = i * tr + jax.lax.broadcasted_iota(jnp.int32, (tr, 1), 0)
    is_img = jnp.logical_and(row >= run_start, row < run_end)
    vis = vbuf[pl.ds(t, tr), :].astype(jnp.float32)       # aligned: vis[u + r]
    x = jnp.where(is_img, vis, text_ref[...].astype(jnp.float32))

    ms = jnp.mean(x * x, axis=-1, keepdims=True)
    xn = x * jax.lax.rsqrt(ms + 1e-6) * g_ref[...]
    h = jax.nn.gelu(
        jnp.dot(xn.astype(jnp.bfloat16), w1_ref[...],
                preferred_element_type=jnp.float32),
        approximate=False)
    y = jnp.dot(h.astype(jnp.bfloat16), w2_ref[...],
                preferred_element_type=jnp.float32)
    o_ref[...] = (x + y).astype(o_ref.dtype)


# ------------------------------ call helpers --------------------------------

def _round_up(x, m):
    return ((x + m - 1) // m) * m


def _row_tile(rows, max_tile=256):
    # Multiple of 8, <= max_tile, and splits rows into >=2 blocks when possible
    # so dimension_semantics=("parallel",) can use both v7x TensorCores.
    t = (rows + 1) // 2
    t = max(8, _round_up(t, 8))
    return min(t, max_tile)


def _patch_row_tile(patches_per_img, max_tile=256):
    # Largest multiple-of-8 divisor of patches_per_img (<= max_tile) so the
    # per-image positional-embedding block can be selected with `i % nb`.
    best = 0
    d = 8
    while d <= min(patches_per_img, max_tile):
        if patches_per_img % d == 0:
            best = d
        d += 8
    assert best, "patches-per-image must have a multiple-of-8 divisor"
    return best


def _cparams():
    return pltpu.CompilerParams(dimension_semantics=("parallel",),
                                vmem_limit_bytes=VMEM_LIMIT_BYTES)


def patch_embed_call(rows, w, b, pos, patches_per_img):
    m, k = rows.shape
    n_out = w.shape[1]
    tr = _patch_row_tile(patches_per_img)
    pos_blocks = patches_per_img // tr
    ce = pl.CostEstimate(flops=2 * m * k * n_out, transcendentals=0,
                         bytes_accessed=m * k * 2 + k * n_out * 2 + m * n_out * 2)
    return pl.pallas_call(
        _patch_embed_kernel,
        out_shape=jax.ShapeDtypeStruct((m, n_out), jnp.bfloat16),
        grid=(pl.cdiv(m, tr),),
        in_specs=[pl.BlockSpec((tr, k), lambda i: (i, 0)),
                  pl.BlockSpec((k, n_out), lambda i: (0, 0)),
                  pl.BlockSpec((tr, n_out), lambda i: (i % pos_blocks, 0)),
                  pl.BlockSpec((1, n_out), lambda i: (0, 0))],
        out_specs=pl.BlockSpec((tr, n_out), lambda i: (i, 0)),
        compiler_params=_cparams(),
        cost_estimate=ce,
    )(rows, w, pos, b)


def mlp1_call(flat, params, cfg, min_out_rows):
    m, k = flat.shape
    n_out = cfg["llm_hidden"]
    tr = _row_tile(m)
    # Output allocation is at least `min_out_rows` rows so the downstream merge
    # kernel's tr-row DMA windows are always in bounds.  Extra rows are never
    # selected (mask), so they can stay uninitialized.
    out_rows = max(_round_up(m, tr), min_out_rows)
    ce = pl.CostEstimate(
        flops=2 * m * (k * n_out + n_out * n_out),
        transcendentals=m * n_out,
        bytes_accessed=m * k * 2 + (k * n_out + n_out * n_out) * 2 + m * n_out * 2)
    return pl.pallas_call(
        _mlp1_kernel,
        out_shape=jax.ShapeDtypeStruct((out_rows, n_out), jnp.bfloat16),
        grid=(pl.cdiv(m, tr),),
        in_specs=[pl.BlockSpec((tr, k), lambda i: (i, 0)),
                  pl.BlockSpec((1, k), lambda i: (0, 0)),
                  pl.BlockSpec((1, k), lambda i: (0, 0)),
                  pl.BlockSpec((k, n_out), lambda i: (0, 0)),
                  pl.BlockSpec((1, n_out), lambda i: (0, 0)),
                  pl.BlockSpec((n_out, n_out), lambda i: (0, 0)),
                  pl.BlockSpec((1, n_out), lambda i: (0, 0))],
        out_specs=pl.BlockSpec((tr, n_out), lambda i: (i, 0)),
        compiler_params=_cparams(),
        cost_estimate=ce,
    )(flat, params["ln_gamma"], params["ln_beta"], params["mlp1_w1"],
      params["mlp1_b1"], params["mlp1_w2"], params["mlp1_b2"])


def merge_lm_block_call(run_info, text, vis, params, tr):
    s_len, h = text.shape
    inter = params["lm_w1"].shape[1]
    ce = pl.CostEstimate(
        flops=2 * s_len * (h * inter + inter * h),
        transcendentals=s_len * inter,
        bytes_accessed=(2 * s_len * h + h * inter + inter * h + s_len * h) * 2)
    return pl.pallas_call(
        _merge_lm_block_kernel,
        out_shape=jax.ShapeDtypeStruct((s_len, h), jnp.bfloat16),
        grid_spec=pltpu.PrefetchScalarGridSpec(
            num_scalar_prefetch=1,
            grid=(pl.cdiv(s_len, tr),),
            in_specs=[pl.BlockSpec((tr, h), lambda i, run: (i, 0)),
                      pl.BlockSpec(memory_space=pl.ANY),        # mlp1 out (HBM)
                      pl.BlockSpec((1, h), lambda i, run: (0, 0)),
                      pl.BlockSpec((h, inter), lambda i, run: (0, 0)),
                      pl.BlockSpec((inter, h), lambda i, run: (0, 0))],
            out_specs=pl.BlockSpec((tr, h), lambda i, run: (i, 0)),
            scratch_shapes=[pltpu.VMEM((2 * tr, h), jnp.bfloat16),
                            pltpu.SemaphoreType.DMA]),
        compiler_params=_cparams(),
        cost_estimate=ce,
    )(run_info, text, vis, params["lm_gamma"], params["lm_w1"], params["lm_w2"])


# -------------------------------- model glue ---------------------------------

def nchw_to_patches(x, p):
    # (N, C, H, W) -> (N, (H/p)*(W/p), C*p*p), matching Conv2d(k=p, stride=p)
    n, c, h, w = x.shape
    x = x.reshape(n, c, h // p, p, w // p, p)
    x = jnp.transpose(x, (0, 2, 4, 1, 3, 5))
    return x.reshape(n, (h // p) * (w // p), c * p * p)


def pixel_shuffle(x, scale_factor=0.5, ps_version="v2"):
    # Exact port of InternVLChatModel.pixel_shuffle (runs on bf16 in XLA).
    n, w, h, c = x.shape
    x = x.reshape(n, w, int(h * scale_factor), int(c / scale_factor))
    x = jnp.transpose(x, (0, 2, 1, 3))
    x = x.reshape(n, int(h * scale_factor), int(w * scale_factor),
                  int(c / (scale_factor * scale_factor)))
    if ps_version != "v1":
        x = jnp.transpose(x, (0, 2, 1, 3))
    return x


def extract_feature(pixel_values, params, cfg, min_out_rows):
    """vision patch model -> pixel_shuffle -> mlp1 (Pallas)."""
    p = cfg["patch_size"]
    vit_c = cfg["vit_hidden"]
    n = pixel_values.shape[0]

    # bf16 + zero channel pad (3 -> 4) so the contraction dim is 4*p*p (=256
    # here): MXU-aligned K, zero channel contributes nothing.
    pv = jnp.pad(pixel_values.astype(jnp.bfloat16), ((0, 0), (0, 1), (0, 0), (0, 0)))
    patches = nchw_to_patches(pv, p)                           # (N, P, 4*p*p)
    num_p = patches.shape[1]
    rows = patches.reshape(n * num_p, -1)

    # Patch embed with fused positional-embedding add (CLS slot skipped — it is
    # dropped by extract_feature anyway, so it is never materialized).
    pos = params["pos_embedding"][0, 1:, :]                    # (P, vit_c) f32
    tok = patch_embed_call(rows, params["w_patch"], params["b_patch"], pos, num_p)

    hw = int(num_p ** 0.5)
    x = tok.reshape(n, hw, hw, vit_c)
    x = pixel_shuffle(x, scale_factor=cfg["downsample_ratio"],
                      ps_version=cfg.get("ps_version", "v2"))
    flat = x.reshape(-1, x.shape[-1])                          # (N*tok, vit_c*4)
    return mlp1_call(flat, params, cfg, min_out_rows)          # (Vp, llm_hidden)


def internvl_forward(input_ids, pixel_values, params, cfg):
    """InternVLChatModel.forward (image + text path)."""
    s = input_ids.shape[0]
    tr_lm = _row_tile(s)

    # language_model.model.get_input_embeddings(input_ids)  (gather = XLA glue)
    inputs_embeds = params["embed_table"][input_ids]           # (S, H) bf16

    # _process_image_input -> extract_feature (Pallas)
    vis = extract_feature(pixel_values, params, cfg, min_out_rows=tr_lm)

    # merge_multimodal_embeddings: only the contiguous-run descriptor is
    # computed in XLA (scalars); the row fetch + select happen in-kernel.
    mask = input_ids == cfg["img_context_token_id"]
    run_start = jnp.argmax(mask).astype(jnp.int32)
    run_len = jnp.sum(mask).astype(jnp.int32)
    run_info = jnp.stack([run_start, run_start + run_len]).astype(jnp.int32)

    # Fused merge + synthetic language_model.model block.
    return merge_lm_block_call(run_info, inputs_embeds, vis, params, tr_lm)


# ----------------------------------- main ------------------------------------

if __name__ == "__main__":
    cfg = dict(
        image_size=32,
        patch_size=8,
        vit_hidden=128,          # lane-dense (>=128) activations everywhere
        downsample_ratio=0.5,
        llm_hidden=128,
        lm_intermediate=256,
        vocab=256,
        seq_len=64,
        num_tiles=4,             # batch*num_images*(1+num_patches) stacked tiles
        img_context_token_id=255,
        ps_version="v2",
    )
    nps = cfg["image_size"] // cfg["patch_size"]                          # 4
    num_patches = nps * nps                                               # 16
    num_image_token = int(num_patches * cfg["downsample_ratio"] ** 2)     # 4
    proj_in = cfg["vit_hidden"] * int(1 / cfg["downsample_ratio"]) ** 2   # 512
    kpp = 4 * cfg["patch_size"] * cfg["patch_size"]                       # 256

    key = jax.random.PRNGKey(0)
    ks = jax.random.split(key, 16)

    params = {
        # Matmul weights stored bf16; f32 accumulation inside the kernels.
        "w_patch": (0.02 * jax.random.normal(
            ks[0], (kpp, cfg["vit_hidden"]), jnp.float32)).astype(jnp.bfloat16),
        "b_patch": 0.01 * jax.random.normal(
            ks[1], (1, cfg["vit_hidden"]), jnp.float32),
        "pos_embedding": 0.02 * jax.random.normal(
            ks[3], (1, num_patches + 1, cfg["vit_hidden"]), jnp.float32),
        "ln_gamma": jnp.ones((1, proj_in), jnp.float32),
        "ln_beta": jnp.zeros((1, proj_in), jnp.float32),
        "mlp1_w1": (0.02 * jax.random.normal(
            ks[4], (proj_in, cfg["llm_hidden"]), jnp.float32)).astype(jnp.bfloat16),
        "mlp1_b1": 0.01 * jax.random.normal(
            ks[5], (1, cfg["llm_hidden"]), jnp.float32),
        "mlp1_w2": (0.02 * jax.random.normal(
            ks[6], (cfg["llm_hidden"], cfg["llm_hidden"]), jnp.float32)
            ).astype(jnp.bfloat16),
        "mlp1_b2": 0.01 * jax.random.normal(
            ks[7], (1, cfg["llm_hidden"]), jnp.float32),
        "embed_table": (0.02 * jax.random.normal(
            ks[8], (cfg["vocab"], cfg["llm_hidden"]), jnp.float32)
            ).astype(jnp.bfloat16),
        "lm_gamma": jnp.ones((1, cfg["llm_hidden"]), jnp.float32),
        "lm_w1": (0.02 * jax.random.normal(
            ks[9], (cfg["llm_hidden"], cfg["lm_intermediate"]), jnp.float32)
            ).astype(jnp.bfloat16),
        "lm_w2": (0.02 * jax.random.normal(
            ks[10], (cfg["lm_intermediate"], cfg["llm_hidden"]), jnp.float32)
            ).astype(jnp.bfloat16),
    }

    # pixel_values: (num_tiles, 3, H, W)  -- NCHW, per InternVLImagePixelInputs
    pixel_values = jax.random.normal(
        ks[11], (cfg["num_tiles"], 3, cfg["image_size"], cfg["image_size"]),
        jnp.float32)

    # input_ids with a contiguous IMG_CONTEXT run of num_tiles*num_image_token
    # tokens at a deliberately non-tile-aligned offset.
    n_vis = cfg["num_tiles"] * num_image_token                            # 16
    input_ids = jax.random.randint(ks[12], (cfg["seq_len"],), 0, 200, jnp.int32)
    run_start = 5
    input_ids = input_ids.at[run_start:run_start + n_vis].set(
        cfg["img_context_token_id"])

    hidden_states = internvl_forward(input_ids, pixel_values, params, cfg)
    hidden_states = jax.block_until_ready(hidden_states)
    assert hidden_states.shape == (cfg["seq_len"], cfg["llm_hidden"])
    assert bool(jnp.all(jnp.isfinite(hidden_states.astype(jnp.float32))))
    print("KERNEL_OK")
</pallas_src>

<mosaic_0001>
module attributes {stable_mosaic.version = 11 : i64} {
  func.func @_patch_embed_kernel(%arg0: i32, %arg1: memref<16x256xbf16, #tpu.memory_space<vmem>>, %arg2: memref<256x128xbf16, #tpu.memory_space<vmem>>, %arg3: memref<16x128xf32, #tpu.memory_space<vmem>>, %arg4: memref<1x128xf32, #tpu.memory_space<vmem>>, %arg5: memref<16x128xbf16, #tpu.memory_space<vmem>>) attributes {dimension_semantics = [#tpu.dimension_semantics<parallel>], iteration_bounds = array<i64: 4>, scalar_prefetch = 0 : i64, scratch_operands = 0 : i64, tpu.core_type = #tpu.core_type<tc>, window_params = [{transform_indices = @transform_0, window_bounds = array<i64: 16, 256>}, {pipeline_mode = #tpu.pipeline_mode<synchronous>, transform_indices = @transform_1, window_bounds = array<i64: 256, 128>}, {transform_indices = @transform_2, window_bounds = array<i64: 16, 128>}, {pipeline_mode = #tpu.pipeline_mode<synchronous>, transform_indices = @transform_3, window_bounds = array<i64: 1, 128>}, {transform_indices = @transform_4, window_bounds = array<i64: 16, 128>}]} {
    %c0 = arith.constant 0 : index
    %c0_0 = arith.constant 0 : index
    %0 = vector.load %arg1[%c0, %c0_0] : memref<16x256xbf16, #tpu.memory_space<vmem>>, vector<16x256xbf16>
    %c0_1 = arith.constant 0 : index
    %c0_2 = arith.constant 0 : index
    %1 = vector.load %arg2[%c0_1, %c0_2] : memref<256x128xbf16, #tpu.memory_space<vmem>>, vector<256x128xbf16>
    %cst = arith.constant dense<0.000000e+00> : vector<16x128xf32>
    %2 = tpu.matmul %0, %1, %cst {dimension_numbers = #tpu.dot_dimension_numbers<[1], [0], [0], [1], [0, 0, 1, 1], [], []>} : vector<16x256xbf16>, vector<256x128xbf16>, vector<16x128xf32> -> vector<16x128xf32>
    %c0_3 = arith.constant 0 : index
    %c0_4 = arith.constant 0 : index
    %3 = vector.load %arg4[%c0_3, %c0_4] : memref<1x128xf32, #tpu.memory_space<vmem>>, vector<1x128xf32>
    %4 = vector.broadcast %3 : vector<1x128xf32> to vector<16x128xf32>
    %5 = arith.addf %2, %4 : vector<16x128xf32>
    %c0_5 = arith.constant 0 : index
    %c0_6 = arith.constant 0 : index
    %6 = vector.load %arg3[%c0_5, %c0_6] : memref<16x128xf32, #tpu.memory_space<vmem>>, vector<16x128xf32>
    %7 = arith.addf %5, %6 : vector<16x128xf32>
    %8 = arith.truncf %7 : vector<16x128xf32> to vector<16x128xbf16>
    %c0_7 = arith.constant 0 : index
    %c0_8 = arith.constant 0 : index
    %9 = vector.load %arg5[%c0_7, %c0_8] : memref<16x128xbf16, #tpu.memory_space<vmem>>, vector<16x128xbf16>
    tpu.vector_store %arg5[%c0_7, %c0_8], %8 {strides = array<i32>} : memref<16x128xbf16, #tpu.memory_space<vmem>>, vector<16x128xbf16>,
    return
  }
  func.func @transform_0(%arg0: i32) -> (i32, i32) {
    %c0_i32 = arith.constant 0 : i32
    %c0_i32_0 = arith.constant 0 : i32
    return %arg0, %c0_i32 : i32, i32
  }
  func.func @transform_1(%arg0: i32) -> (i32, i32) {
    %c0_i32 = arith.constant 0 : i32
    %c0_i32_0 = arith.constant 0 : i32
    %c0_i32_1 = arith.constant 0 : i32
    return %c0_i32, %c0_i32_0 : i32, i32
  }
  func.func @transform_2(%arg0: i32) -> (i32, i32) {
    %c1_i32 = arith.constant 1 : i32
    %c0_i32 = arith.constant 0 : i32
    %0 = arith.cmpi eq, %c1_i32, %c0_i32 : i32
    %c1_i32_0 = arith.constant 1 : i32
    %1 = arith.select %0, %c1_i32_0, %c1_i32 : i32
    %2 = arith.remsi %arg0, %1 : i32
    %c0_i32_1 = arith.constant 0 : i32
    %3 = arith.cmpi ne, %2, %c0_i32_1 : i32
    %c0_i32_2 = arith.constant 0 : i32
    %4 = arith.cmpi slt, %2, %c0_i32_2 : i32
    %c0_i32_3 = arith.constant 0 : i32
    %5 = arith.cmpi slt, %1, %c0_i32_3 : i32
    %6 = arith.xori %4, %5 : i1
    %7 = arith.andi %6, %3 : i1
    %8 = arith.addi %2, %1 : i32
    %9 = arith.select %7, %8, %2 : i32
    %c0_i32_4 = arith.constant 0 : i32
    %c0_i32_5 = arith.constant 0 : i32
    return %9, %c0_i32_4 : i32, i32
  }
  func.func @transform_3(%arg0: i32) -> (i32, i32) {
    %c0_i32 = arith.constant 0 : i32
    %c0_i32_0 = arith.constant 0 : i32
    %c0_i32_1 = arith.constant 0 : i32
    return %c0_i32, %c0_i32_0 : i32, i32
  }
  func.func @transform_4(%arg0: i32) -> (i32, i32) {
    %c0_i32 = arith.constant 0 : i32
    %c0_i32_0 = arith.constant 0 : i32
    return %arg0, %c0_i32 : i32, i32
  }
}

</mosaic_0001>

<llo_original>
// kernel: tpu_custom_call.1
$region0: #{tpu_custom_call.1}
  #allocation0 [shape = 'u32[]', space=smem, size = 0x4, offset = 0x4, fixed_abs, tag = 'smem constant byte address 0x4 - core index']
  #allocation1 [shape = 'u32[144,128]{1,0:T(1,128)}', space=vmem, size = 0x12000, scoped, tag = 'internal scratch']
  %s0 = inlined_call_operand.hbm [shape: bf16[64,256], index: 0, kind: input, shape index: {}]
  %s1 = inlined_call_operand.hbm [shape: bf16[256,128], index: 1, kind: input, shape index: {}]
  %s2 = inlined_call_operand.hbm [shape: f32[16,128], index: 2, kind: input, shape index: {}]
  %s3 = inlined_call_operand.vmem [shape: f32[1,128], index: 3, kind: input, shape index: {}]
  %s4 = inlined_call_operand.hbm [shape: bf16[64,128], index: 4, kind: output, shape index: {}]
  %s5 = sld [smem:[#allocation0]]
  $region61: #{tpu_custom_call.1} parent=0
    _
  %s7 = ssub.s32 1, %s5
  %s8 = scalar_select 0, %s7, %s5
  $region1: #{tpu_custom_call.1} parent=0
    #allocation2 [shape = 'u8[16384]{0}', space=vmem, size = 0x4000, scoped, tag = 'input window, operand 0']
    #allocation3 [shape = 's32[2]{0}', space=sflag, size = 0x8, scoped, tag = 'scoped memory for tpu_custom_call.1']
    #allocation4 [shape = 's32[2]{0}', space=sflag, size = 0x8, scoped, tag = 'scoped memory for tpu_custom_call.1']
    #allocation5 [shape = 'u8[65536]{0}', space=vmem, size = 0x10000, scoped, tag = 'input window, operand 1, single buffered']
    #allocation6 [shape = 's32[1]{0}', space=sflag, size = 0x4, scoped, tag = 'scoped memory for tpu_custom_call.1']
    #allocation7 [shape = 'u8[8192]{0}', space=vmem, size = 0x2000, scoped, tag = 'input window, operand 2, single buffered']
    #allocation8 [shape = 'u8[8192]{0}', space=vmem, size = 0x2000, scoped, tag = 'output window, operand 0']
    %9 = vsyncpa [#allocation3], 0
    %s10 = scalar_lea.sflag [#allocation3], 1
    %11 = vsyncpa %s10, 0
    %12 = vsyncpa [#allocation6], 0
    %13 = vsyncpa [#allocation4], 0
    %s14 = scalar_lea.sflag [#allocation4], 1
    %15 = vsyncpa %s14, 0
    loop: start=0, step=1, limit=6
    $region2: #{tpu_custom_call.1} parent=1 // loop_pre_header
      _
    $region3: #{tpu_custom_call.1} parent=1 // loop_header
      %s17 = sphi 0, %s21
      %p18 = scmp.ge.s32.totalorder %s17, 6
      %s27 = sphi 0, %s29
      %s30 = sphi 0, %s27
      %s31 = sphi 0, %s30
      %s47 = sphi 0, %s31
      %s51 = sphi 0, %s51
      %s53 = sphi 0, %s51
      %s54 = sphi 0, %s53
      %s68 = sphi 0, %s54
      %s72 = sphi 0, %s72
      %s74 = sphi 0, %s72
      %s75 = sphi 0, %s74
      %s89 = sphi 0, %s75
      %s93 = sphi 0, %s93
      %s95 = sphi 0, %s93
      %s96 = sphi 0, %s95
      %s110 = sphi 0, %s96
      %s116 = sphi 0, %s118
      %s119 = sphi 0, %s116
      %s120 = sphi 0, %s119
      %s136 = sphi 0, %s120
    $region4: #{tpu_custom_call.1} parent=1 // loop_header_branch
      %20 = sbr.rel (%p18) target = $region8
    $region5: #{tpu_custom_call.1} parent=1 // loop_body
      %s22 = ssub.s32 %s17, 1
      %s23 = ssub.s32 %s17, 2
      %s24 = sadd.s32 %s17, 1
      %s25 = ssub.s32 %s17, %s24
      %p26 = scmp.eq.s32.totalorder %s25, 0
      %s28 = sadd.s32 %s27, 1
      %s29 = scalar_select %p26, %s27, %s28
      %p32 = pneg %p26
      %p33 = scmp.eq.s32.totalorder %s17, 3
      %p34 = por %p32, %p33
      %p35 = scmp.ne.s32.totalorder %s27, %s30
      %p36 = scmp.eq.s32.totalorder %s17, 0
      %p37 = por %p35, %p36
      %p38 = scmp.ne.s32.totalorder %s27, %s30
      %p39 = scmp.eq.s32.totalorder %s22, 3
      %p40 = por %p38, %p39
      %p41 = scmp.ne.s32.totalorder %s30, %s31
      %p42 = scmp.eq.s32.totalorder %s22, 0
      %p43 = por %p41, %p42
      %p44 = scmp.ne.s32.totalorder %s30, %s31
      %p45 = scmp.eq.s32.totalorder %s23, 3
      %p46 = por %p44, %p45
      %p48 = scmp.ne.s32.totalorder %s31, %s47
      %p49 = scmp.eq.s32.totalorder %s23, 0
      %p50 = por %p48, %p49
      %s52 = sadd.s32 %s51, 1
      %p55 = scmp.eq.s32.totalorder %s17, 3
      %p56 = scmp.ne.s32.totalorder %s51, %s53
      %p57 = scmp.eq.s32.totalorder %s17, 0
      %p58 = por %p56, %p57
      %p59 = scmp.ne.s32.totalorder %s51, %s53
      %p60 = scmp.eq.s32.totalorder %s22, 3
      %p61 = por %p59, %p60
      %p62 = scmp.ne.s32.totalorder %s53, %s54
      %p63 = scmp.eq.s32.totalorder %s22, 0
      %p64 = por %p62, %p63
      %p65 = scmp.ne.s32.totalorder %s53, %s54
      %p66 = scmp.eq.s32.totalorder %s23, 3
      %p67 = por %p65, %p66
      %p69 = scmp.ne.s32.totalorder %s54, %s68
      %p70 = scmp.eq.s32.totalorder %s23, 0
      %p71 = por %p69, %p70
      %s73 = sadd.s32 %s72, 1
      %p76 = scmp.eq.s32.totalorder %s17, 3
      %p77 = scmp.ne.s32.totalorder %s72, %s74
      %p78 = scmp.eq.s32.totalorder %s17, 0
      %p79 = por %p77, %p78
      %p80 = scmp.ne.s32.totalorder %s72, %s74
      %p81 = scmp.eq.s32.totalorder %s22, 3
      %p82 = por %p80, %p81
      %p83 = scmp.ne.s32.totalorder %s74, %s75
      %p84 = scmp.eq.s32.totalorder %s22, 0
      %p85 = por %p83, %p84
      %p86 = scmp.ne.s32.totalorder %s74, %s75
      %p87 = scmp.eq.s32.totalorder %s23, 3
      %p88 = por %p86, %p87
      %p90 = scmp.ne.s32.totalorder %s75, %s89
      %p91 = scmp.eq.s32.totalorder %s23, 0
      %p92 = por %p90, %p91
      %s94 = sadd.s32 %s93, 1
      %p97 = scmp.eq.s32.totalorder %s17, 3
      %p98 = scmp.ne.s32.totalorder %s93, %s95
      %p99 = scmp.eq.s32.totalorder %s17, 0
      %p100 = por %p98, %p99
      %p101 = scmp.ne.s32.totalorder %s93, %s95
      %p102 = scmp.eq.s32.totalorder %s22, 3
      %p103 = por %p101, %p102
      %p104 = scmp.ne.s32.totalorder %s95, %s96
      %p105 = scmp.eq.s32.totalorder %s22, 0
      %p106 = por %p104, %p105
      %p107 = scmp.ne.s32.totalorder %s95, %s96
      %p108 = scmp.eq.s32.totalorder %s23, 3
      %p109 = por %p107, %p108
      %p111 = scmp.ne.s32.totalorder %s96, %s110
      %p112 = scmp.eq.s32.totalorder %s23, 0
      %p113 = por %p111, %p112
      %s114 = ssub.s32 %s17, %s24
      %p115 = scmp.eq.s32.totalorder %s114, 0
      %s117 = sadd.s32 %s116, 1
      %s118 = scalar_select %p115, %s116, %s117
      %p121 = pneg %p115
      %p122 = scmp.eq.s32.totalorder %s17, 3
      %p123 = por %p121, %p122
      %p124 = scmp.ne.s32.totalorder %s116, %s119
      %p125 = scmp.eq.s32.totalorder %s17, 0
      %p126 = por %p124, %p125
      %p127 = scmp.ne.s32.totalorder %s116, %s119
      %p128 = scmp.eq.s32.totalorder %s22, 3
      %p129 = por %p127, %p128
      %p130 = scmp.ne.s32.totalorder %s119, %s120
      %p131 = scmp.eq.s32.totalorder %s22, 0
      %p132 = por %p130, %p131
      %p133 = scmp.ne.s32.totalorder %s119, %s120
      %p134 = scmp.eq.s32.totalorder %s23, 3
      %p135 = por %p133, %p134
      %p137 = scmp.ne.s32.totalorder %s120, %s136
      %p138 = scmp.eq.s32.totalorder %s23, 0
      %p139 = por %p137, %p138
      %p140 = scmp.le.s32.totalorder 1, %s17
      %p141 = scmp.lt.s32.totalorder %s17, 5
      %p142 = pnand %p140, %p141
      %p143 = pneg %p142
      // Predicated region
      $region9: #{tpu_custom_call.1} parent=5 // pred_check
        _
      $region10: #{tpu_custom_call.1} parent=5 // pred_check_branch
        %145 = sbr.rel (%p142) target = $region12
      $region11: #{tpu_custom_call.1} parent=5 // pred_region
        %s146 = ssub.s32 %s17, 1
        // Predicated region
        $region13: #{tpu_custom_call.1} parent=11 // pred_check
          %p147 = pneg %p64
        $region14: #{tpu_custom_call.1} parent=11 // pred_check_branch
          %149 = sbr.rel (%p147) target = $region16
        $region15: #{tpu_custom_call.1} parent=11 // pred_region
          %s151 = ssub.s32 2048, 2048
          %152 = vsyncadd [#allocation6], %s151
          %s153 = sshll.u32 [#allocation5], 4
          %s154 = int_to_ptr.vmem [resolvable:$true] %s153
          %159 = dma.hbm_to_vmem [thread:$0]  %s1, 2048, %s154, [#allocation6], 64, 64, 4
        $region16: #{tpu_custom_call.1} parent=11 // pred_fallthru
          _
        // Predicated region
        $region17: #{tpu_custom_call.1} parent=11 // pred_check
          %p160 = pneg %p85
        $region18: #{tpu_custom_call.1} parent=11 // pred_check_branch
          %162 = sbr.rel (%p160) target = $region20
        $region19: #{tpu_custom_call.1} parent=11 // pred_region
          %s164 = ssub.s32 256, 256
          %165 = vsyncadd [#allocation6], %s164
          %s166 = sshll.u32 [#allocation7], 4
          %s167 = int_to_ptr.vmem [resolvable:$true] %s166
          %172 = dma.hbm_to_vmem [thread:$0]  %s2, 256, %s167, [#allocation6], 128, 128, 8
        $region20: #{tpu_custom_call.1} parent=11 // pred_fallthru
          _
        // Predicated region
        $region21: #{tpu_custom_call.1} parent=11 // pred_check
          %p173 = pneg %p106
        $region22: #{tpu_custom_call.1} parent=11 // pred_check_branch
          %175 = sbr.rel (%p173) target = $region24
        $region23: #{tpu_custom_call.1} parent=11 // pred_region
          _
        $region24: #{tpu_custom_call.1} parent=11 // pred_fallthru
          _
      $region12: #{tpu_custom_call.1} parent=5 // pred_fallthru
        _
      %p176 = scmp.lt.s32.totalorder %s17, 4
      // Predicated region
      $region25: #{tpu_custom_call.1} parent=5 // pred_check
        %p177 = pneg %p176
      $region26: #{tpu_custom_call.1} parent=5 // pred_check_branch
        %179 = sbr.rel (%p177) target = $region28
      $region27: #{tpu_custom_call.1} parent=5 // pred_region
        // Predicated region
        $region29: #{tpu_custom_call.1} parent=27 // pred_check
          %p180 = pneg %p37
        $region30: #{tpu_custom_call.1} parent=27 // pred_check_branch
          %182 = sbr.rel (%p180) target = $region32
        $region31: #{tpu_custom_call.1} parent=27 // pred_region
          %s183 = sand.u32 %s27, 1
          %s184 = scalar_lea.sflag [#allocation3], %s183
          %s185 = sand.u32 %s27, 1
          %s186 = smul.addr %s185, 16
          %s187 = scalar_lea.vmem [#allocation2], %s186
          %s188 = smul.u32 2, %s17
          %s190 = ssub.s32 256, 256
          %191 = vsyncadd %s184, %s190
          %s192 = smul.addr %s188, 2
          %s193 = smul.addr %s192, 64
          %s194 = scalar_lea.hbm %s0, %s193
          %s195 = sshll.u32 %s187, 4
          %s196 = int_to_ptr.vmem [resolvable:$true] %s195
          %201 = dma.hbm_to_vmem [thread:$0]  %s194, 256, %s196, %s184, 128, 128, 8
        $region32: #{tpu_custom_call.1} parent=27 // pred_fallthru
          _
      $region28: #{tpu_custom_call.1} parent=5 // pred_fallthru
        _
      %p202 = scmp.le.s32.totalorder 1, %s17
      %p203 = scmp.lt.s32.totalorder %s17, 5
      %p204 = pnand %p202, %p203
      %p205 = pneg %p204
      // Predicated region
      $region33: #{tpu_custom_call.1} parent=5 // pred_check
        _
      $region34: #{tpu_custom_call.1} parent=5 // pred_check_branch
        %207 = sbr.rel (%p204) target = $region36
      $region35: #{tpu_custom_call.1} parent=5 // pred_region
        %s208 = ssub.s32 %s17, 1
        %s209 = sand.u32 %s30, 1
        %s210 = scalar_lea.sflag [#allocation3], %s209
        %s211 = sand.u32 %s30, 1
        %s212 = smul.addr %s211, 16
        %s213 = scalar_lea.vmem [#allocation2], %s212
        // Predicated region
        $region37: #{tpu_custom_call.1} parent=35 // pred_check
          %p214 = pneg %p43
        $region38: #{tpu_custom_call.1} parent=35 // pred_check_branch
          %216 = sbr.rel (%p214) target = $region40
        $region39: #{tpu_custom_call.1} parent=35 // pred_region
          %217 = dma.done %s210, 256
        $region40: #{tpu_custom_call.1} parent=35 // pred_fallthru
          _
        // Predicated region
        $region41: #{tpu_custom_call.1} parent=35 // pred_check
          %p218 = pneg %p64
        $region42: #{tpu_custom_call.1} parent=35 // pred_check_branch
          %220 = sbr.rel (%p218) target = $region44
        $region43: #{tpu_custom_call.1} parent=35 // pred_region
          %221 = dma.done [#allocation6], 2048
        $region44: #{tpu_custom_call.1} parent=35 // pred_fallthru
          _
        // Predicated region
        $region45: #{tpu_custom_call.1} parent=35 // pred_check
          %p222 = pneg %p85
        $region46: #{tpu_custom_call.1} parent=35 // pred_check_branch
          %224 = sbr.rel (%p222) target = $region48
        $region47: #{tpu_custom_call.1} parent=35 // pred_region
          %225 = dma.done [#allocation6], 256
        $region48: #{tpu_custom_call.1} parent=35 // pred_fallthru
          _
        %s226 = sand.u32 %s30, 1
        %s227 = scalar_lea.sflag [#allocation3], %s226
        %s228 = sand.u32 %s30, 1
        %s229 = smul.addr %s228, 16
        %s230 = scalar_lea.vmem [#allocation2], %s229
        %p231 = pneg %p43
        %p232 = pneg %p40
        %p233 = pneg %p64
        %p234 = pneg %p61
        %p235 = pneg %p85
        %p236 = pneg %p82
        %p237 = pneg %p106
        %p238 = pneg %p103
        %p239 = pneg %p132
        %p240 = pneg %p129
        %s241 = sand.u32 %s119, 1
        %s242 = scalar_lea.sflag [#allocation4], %s241
        %s243 = sand.u32 %s119, 1
        %s244 = smul.addr %s243, 8
        %s245 = scalar_lea.vmem [#allocation8], %s244
        %s246 = smul.u32 2, %s22
        %s247 = smul.u32 2, %s22
        %v249 = vld [vmem:[%s213] sm:$0xff]
        %v250 = vld [vmem:[%s213 + $0x8] sm:$0xff]
        %v251 = vld [vmem:[#allocation5] sm:$0xf]
        %v252 = vld [vmem:[#allocation5 + $0x4] sm:$0xf]
        %v253 = vld [vmem:[#allocation5 + $0x8] sm:$0xf]
        %v254 = vld [vmem:[#allocation5 + $0xc] sm:$0xf]
        %v255 = vld [vmem:[#allocation5 + $0x10] sm:$0xf]
        %v256 = vld [vmem:[#allocation5 + $0x14] sm:$0xf]
        %v257 = vld [vmem:[#allocation5 + $0x18] sm:$0xf]
        %v258 = vld [vmem:[#allocation5 + $0x1c] sm:$0xf]
        %v259 = vld [vmem:[#allocation5 + $0x20] sm:$0xf]
        %v260 = vld [vmem:[#allocation5 + $0x24] sm:$0xf]
        %v261 = vld [vmem:[#allocation5 + $0x28] sm:$0xf]
        %v262 = vld [vmem:[#allocation5 + $0x2c] sm:$0xf]
        %v263 = vld [vmem:[#allocation5 + $0x30] sm:$0xf]
        %v264 = vld [vmem:[#allocation5 + $0x34] sm:$0xf]
        %v265 = vld [vmem:[#allocation5 + $0x38] sm:$0xf]
        %v266 = vld [vmem:[#allocation5 + $0x3c] sm:$0xf]
        %v267 = vld [vmem:[#allocation5 + $0x40] sm:$0xf]
        %v268 = vld [vmem:[#allocation5 + $0x44] sm:$0xf]
        %v269 = vld [vmem:[#allocation5 + $0x48] sm:$0xf]
        %v270 = vld [vmem:[#allocation5 + $0x4c] sm:$0xf]
        %v271 = vld [vmem:[#allocation5 + $0x50] sm:$0xf]
        %v272 = vld [vmem:[#allocation5 + $0x54] sm:$0xf]
        %v273 = vld [vmem:[#allocation5 + $0x58] sm:$0xf]
        %v274 = vld [vmem:[#allocation5 + $0x5c] sm:$0xf]
        %v275 = vld [vmem:[#allocation5 + $0x60] sm:$0xf]
        %v276 = vld [vmem:[#allocation5 + $0x64] sm:$0xf]
        %v277 = vld [vmem:[#allocation5 + $0x68] sm:$0xf]
        %v278 = vld [vmem:[#allocation5 + $0x6c] sm:$0xf]
        %v279 = vld [vmem:[#allocation5 + $0x70] sm:$0xf]
        %v280 = vld [vmem:[#allocation5 + $0x74] sm:$0xf]
        %v281 = vld [vmem:[#allocation5 + $0x78] sm:$0xf]
        %v282 = vld [vmem:[#allocation5 + $0x7c] sm:$0xf]
        %v283 = vld [vmem:[%s3] sm:$0x1]
        %v285 = vlaneseq
        %v286 = vshrl.u32 %v285, 7
        %v287 = vsub.s32 0, %v286
        %v288 = vrot.slane %v283, %v287
        %v292 = vunpack.c.l.b16 %v249
        %v293 = vunpack.c.h.b16 %v249
        %v294 = vunpack.c.l.b16 %v250
        %v295 = vunpack.c.h.b16 %v250
        %v296 = vpack.c.b16 %v294, %v292
        %v297 = vpack.c.b16 %v295, %v293
        %v332 = vunpack.c.l.b16 %v251
        %v333 = vunpack.c.l.b16 %v252
        %v334 = vunpack.c.l.b16 %v253
        %v335 = vunpack.c.l.b16 %v254
        %v336 = vunpack.c.l.b16 %v255
        %v337 = vunpack.c.l.b16 %v256
        %v338 = vunpack.c.l.b16 %v257
        %v339 = vunpack.c.l.b16 %v258
        %v340 = vunpack.c.l.b16 %v259
        %v341 = vunpack.c.l.b16 %v260
        %v342 = vunpack.c.l.b16 %v261
        %v343 = vunpack.c.l.b16 %v262
        %v344 = vunpack.c.l.b16 %v263
        %v345 = vunpack.c.l.b16 %v264
        %v346 = vunpack.c.l.b16 %v265
        %v347 = vunpack.c.l.b16 %v266
        %v348 = vunpack.c.l.b16 %v267
        %v349 = vunpack.c.l.b16 %v268
        %v350 = vunpack.c.l.b16 %v269
        %v351 = vunpack.c.l.b16 %v270
        %v352 = vunpack.c.l.b16 %v271
        %v353 = vunpack.c.l.b16 %v272
        %v354 = vunpack.c.l.b16 %v273
        %v355 = vunpack.c.l.b16 %v274
        %v356 = vunpack.c.l.b16 %v275
        %v357 = vunpack.c.l.b16 %v276
        %v358 = vunpack.c.l.b16 %v277
        %v359 = vunpack.c.l.b16 %v278
        %v360 = vunpack.c.l.b16 %v279
        %v361 = vunpack.c.l.b16 %v280
        %v362 = vunpack.c.l.b16 %v281
        %v363 = vunpack.c.l.b16 %v282
        %v364 = vpack.c.b16 %v333, %v332
        %v365 = vpack.c.b16 %v335, %v334
        %v366 = vpack.c.b16 %v337, %v336
        %v367 = vpack.c.b16 %v339, %v338
        %v368 = vpack.c.b16 %v341, %v340
        %v369 = vpack.c.b16 %v343, %v342
        %v370 = vpack.c.b16 %v345, %v344
        %v371 = vpack.c.b16 %v347, %v346
        %v372 = vpack.c.b16 %v349, %v348
        %v373 = vpack.c.b16 %v351, %v350
        %v374 = vpack.c.b16 %v353, %v352
        %v375 = vpack.c.b16 %v355, %v354
        %v376 = vpack.c.b16 %v357, %v356
        %v377 = vpack.c.b16 %v359, %v358
        %v378 = vpack.c.b16 %v361, %v360
        %v379 = vpack.c.b16 %v363, %v362
        %396 = vmatprep.subr.bf16.mxu0 0
        %397 = vmatpush1.bf16.msra.mxu0 %v364
        %398 = vmatprep.subr.bf16.mxu0 0
        %399 = vmatpush1.bf16.msra.mxu0 %v365
        %400 = vmatprep.subr.bf16.mxu0 0
        %401 = vmatpush1.bf16.msra.mxu0 %v366
        %402 = vmatprep.subr.bf16.mxu0 0
        %403 = vmatpush1.bf16.msra.mxu0 %v367
        %404 = vmatprep.subr.bf16.mxu0 0
        %405 = vmatpush1.bf16.msra.mxu0 %v368
        %406 = vmatprep.subr.bf16.mxu0 0
        %407 = vmatpush1.bf16.msra.mxu0 %v369
        %408 = vmatprep.subr.bf16.mxu0 0
        %409 = vmatpush1.bf16.msra.mxu0 %v370
        %410 = vmatprep.subr.bf16.mxu0 0
        %411 = vmatpush1.bf16.msra.mxu0 %v371
        %412 = vmatprep.subr.bf16.mxu0 0
        %413 = vmatpush1.bf16.msra.mxu0 %v372
        %414 = vmatprep.subr.bf16.mxu0 0
        %415 = vmatpush1.bf16.msra.mxu0 %v373
        %416 = vmatprep.subr.bf16.mxu0 0
        %417 = vmatpush1.bf16.msra.mxu0 %v374
        %418 = vmatprep.subr.bf16.mxu0 0
        %419 = vmatpush1.bf16.msra.mxu0 %v375
        %420 = vmatprep.subr.bf16.mxu0 0
        %421 = vmatpush1.bf16.msra.mxu0 %v376
        %422 = vmatprep.subr.bf16.mxu0 0
        %423 = vmatpush1.bf16.msra.mxu0 %v377
        %424 = vmatprep.subr.bf16.mxu0 0
        %425 = vmatpush1.bf16.msra.mxu0 %v378
        %426 = vmatprep.subr.bf16.mxu0 0
        %427 = vmatpush1.bf16.msra.mxu0 %v379
        %428 = vmatprep.mubr.bf16.mxu0 %v297
        %429 = vmatmul.mubr.bf16.gmra.mrb[0].mxu0 %v296
        %v430 = vpop.f32.mrb[0].mxu0
        %v431 = vadd.f32 %v288, %v430
        %v432 = vpop.f32.mrb[0].mxu0
        %v433 = vpop.f32.mrb[0].mxu0
        %v434 = vadd.f32 %v288, %v433
        %v435 = vpop.f32.mrb[0].mxu0
        %436 = vdwg.mxu0
        %v437 = vld [vmem:[#allocation7] sm:$0xff]
        %v438 = vld [vmem:[#allocation7 + $0x8] sm:$0xff]
        %v439 = vadd.f32 %v431, %v437
        %v440 = vadd.f32 %v434, %v438
        %v441 = vpack.c.bf16 %v440, %v439
        %v443 = vunpack.c.l.b16 %v441
        %v444 = vunpack.c.h.b16 %v441
        %v445 = vpack.c.b16 %v443, %v443
        %v446 = vpack.c.b16 %v444, %v444
        %449 = vst [vmem:[%s245] sm:$0xf] %v445
        %450 = vst [vmem:[%s245 + $0x4] sm:$0xf] %v446
        %s451 = sand.u32 %s119, 1
        %s452 = scalar_lea.sflag [#allocation4], %s451
        %s453 = sand.u32 %s119, 1
        %s454 = smul.addr %s453, 8
        %s455 = scalar_lea.vmem [#allocation8], %s454
        // Predicated region
        $region49: #{tpu_custom_call.1} parent=35 // pred_check
          %p456 = pneg %p129
        $region50: #{tpu_custom_call.1} parent=35 // pred_check_branch
          %458 = sbr.rel (%p456) target = $region52
        $region51: #{tpu_custom_call.1} parent=35 // pred_region
          %s459 = smul.u32 2, %s22
          %s461 = ssub.s32 128, 128
          %462 = vsyncadd %s452, %s461
          %s463 = smul.addr %s459, 64
          %s464 = scalar_lea.hbm %s4, %s463
          %s465 = sshll.u32 %s455, 4
          %s466 = int_to_ptr.vmem [resolvable:$true] %s465
          %471 = dma.vmem_to_hbm [thread:$0]  %s466, 128, %s464, %s452, 64, 64, 4
        $region52: #{tpu_custom_call.1} parent=35 // pred_fallthru
          _
      $region36: #{tpu_custom_call.1} parent=5 // pred_fallthru
        _
      %p472 = scmp.le.s32.totalorder 2, %s17
      // Predicated region
      $region53: #{tpu_custom_call.1} parent=5 // pred_check
        %p473 = pneg %p472
      $region54: #{tpu_custom_call.1} parent=5 // pred_check_branch
        %475 = sbr.rel (%p473) target = $region56
      $region55: #{tpu_custom_call.1} parent=5 // pred_region
        %s476 = ssub.s32 %s17, 2
        // Predicated region
        $region57: #{tpu_custom_call.1} parent=55 // pred_check
          %p477 = pneg %p135
        $region58: #{tpu_custom_call.1} parent=55 // pred_check_branch
          %479 = sbr.rel (%p477) target = $region60
        $region59: #{tpu_custom_call.1} parent=55 // pred_region
          %s480 = sand.u32 %s120, 1
          %s481 = scalar_lea.sflag [#allocation4], %s480
          %s482 = sand.u32 %s120, 1
          %s483 = smul.addr %s482, 8
          %s484 = scalar_lea.vmem [#allocation8], %s483
          %485 = dma.done %s481, 128
        $region60: #{tpu_custom_call.1} parent=55 // pred_fallthru
          _
      $region56: #{tpu_custom_call.1} parent=5 // pred_fallthru
        _
    $region6: #{tpu_custom_call.1} parent=1 // loop_footer
      %s21 = sadd.s32 1, %s17
    $region7: #{tpu_custom_call.1} parent=1 // loop_footer_branch
      %16 = sbr.rel target = $region3
    $region8: #{tpu_custom_call.1} parent=1 // loop_exit
      _
    %486 = vsyncpa [#allocation3], 1
    %s487 = scalar_lea.sflag [#allocation3], 1
    %488 = vsyncpa %s487, 1
    %489 = vsyncpa [#allocation6], 1
    %490 = vsyncpa [#allocation4], 1
    %s491 = scalar_lea.sflag [#allocation4], 1
    %492 = vsyncpa %s491, 1

</llo_original>
